<compile_context>
chip_gen: v7x
topology: tpu7x:2x2x1
jax: 0.10.0
libtpu: 0.0.40
codegen_flags: <defaults>
</compile_context>

<pallas_src>
import functools

import jax
import jax.numpy as jnp
from jax.experimental import pallas as pl
from jax.experimental.pallas import tpu as pltpu


def _round_up(x, m):
    return ((x + m - 1) // m) * m


def _cdiv(a, b):
    return -(-a // b)


# ---------------------------------------------------------------------------
# Kernel body: the whole MLP for one batch tile.  Weights/biases are resident
# VMEM blocks (index_map always (0, 0)); intermediates live in vregs/VMEM.
# ---------------------------------------------------------------------------
def _fused_mlp_kernel(*refs, activations):
    x_ref = refs[0]
    o_ref = refs[-1]
    wb = refs[1:-1]
    num_layers = len(wb) // 2

    h = x_ref[...]                                  # (TB, D_in), input dtype
    for l in range(num_layers):
        w = wb[2 * l][...]                          # (in_d, out_d), param dtype
        b = wb[2 * l + 1][...]                      # (1, out_d), f32
        # Cast the streamed activation to the weight storage dtype (bf16 fast
        # path) and accumulate on the MXU in f32.
        h = jnp.dot(h.astype(w.dtype), w, preferred_element_type=jnp.float32)
        h = h + b.astype(jnp.float32)
        act = activations[l]
        if act == "relu":
            h = jnp.maximum(h, 0.0)
        elif act == "tanh":
            h = jnp.tanh(h)
        elif act in ("identity", "linear", None):
            pass
        else:
            # TODO(synk): other activation callables from the PyTorch module.
            raise ValueError(f"unsupported activation: {act}")
    o_ref[...] = h.astype(o_ref.dtype)


# ---------------------------------------------------------------------------
# One-time parameter preprocessing (hoisted out of the per-call path).
# ---------------------------------------------------------------------------
def prepare_mlp_params(params, activations, param_dtype=jnp.bfloat16):
    """Pad + cast parameters once.

    * weights cast to `param_dtype` (bf16 default; jnp.float32 for exact path),
    * internal feature dims zero-padded to multiples of 128 (lane-dense
      intermediates / MXU-friendly); first-layer input and last-layer output
      dims are kept un-padded so streamed x / out carry no zero lanes,
    * biases kept in f32 (tiny) as (1, out_d) rows.
    """
    num_layers = len(params)
    assert len(activations) == num_layers
    dims = [params[0][0].shape[0]] + [w.shape[1] for (w, _) in params]

    flat = []
    stored_out_dims = []
    for l, (w, b) in enumerate(params):
        in_d = dims[l] if l == 0 else _round_up(dims[l], 128)
        out_d = dims[l + 1] if l == num_layers - 1 else _round_up(dims[l + 1], 128)
        w_p = (jnp.zeros((in_d, out_d), param_dtype)
               .at[: dims[l], : dims[l + 1]].set(w.astype(param_dtype)))
        b_p = (jnp.zeros((1, out_d), jnp.float32)
               .at[0, : dims[l + 1]].set(b.astype(jnp.float32)))
        flat += [w_p, b_p]
        stored_out_dims.append(out_d)

    return {
        "flat": flat,
        "dims": dims,
        "stored_out_dims": stored_out_dims,
        "activations": tuple(activations),
        "param_dtype": param_dtype,
    }


# Resolved on first call: does this jax build accept pl.Buffered(1) on a
# top-level pallas_call BlockSpec?  Falls back to default buffering if not.
_SINGLE_BUFFER_WEIGHTS_OK = None


def mlp_forward(x, prepared, *, batch_tile=512):
    """Fused MLP forward (eval mode: dropout = identity).

    x: (B, D_in).  `prepared` comes from prepare_mlp_params().
    """
    global _SINGLE_BUFFER_WEIGHTS_OK

    flat = prepared["flat"]
    activations = prepared["activations"]
    dims = prepared["dims"]
    stored_out_dims = prepared["stored_out_dims"]
    num_layers = len(activations)

    B, D_in = x.shape
    assert D_in == dims[0], f"input dim {D_in} != expected {dims[0]}"
    D_out = dims[-1]                       # final layer stored un-padded
    out_dtype = x.dtype

    def isize(dt):
        return jnp.dtype(dt).itemsize

    # --- batch tile selection ------------------------------------------------
    TB = min(batch_tile, _round_up(B, 8))
    # Megacore: prefer >= 2 grid steps when the batch allows it so both v7x
    # TensorCores get work under dimension_semantics=("parallel",).
    if B >= 16 and _cdiv(B, TB) < 2:
        TB = max(8, _round_up(_cdiv(B, 2), 8))

    # --- explicit VMEM budget (vmem_limit_bytes + v7x 64 MiB guard) ----------
    def vmem_estimate(tb):
        n = 2 * tb * D_in * isize(x.dtype)            # streamed x (double-buffered)
        n += 2 * tb * D_out * isize(out_dtype)        # streamed out (double-buffered)
        wbuf = 1 if _SINGLE_BUFFER_WEIGHTS_OK else 2  # Buffered(1) halves this
        n += sum(wbuf * a.size * isize(a.dtype) for a in flat)
        max_d = max([D_in] + list(stored_out_dims))
        n += 3 * tb * max_d * 4                       # f32 intermediates + casts
        return n

    budget = 40 * (1 << 20)   # conservative even for v7x (64 MiB phys / 32 MiB scoped)
    while vmem_estimate(TB) > budget and TB > 8:
        TB = max(8, ((TB // 2) // 8) * 8)
    # TODO(synk): if the resident weights alone blow the budget (very large MLPs
    # on v7x), fall back to per-layer pallas_calls / K-tiled accumulation.

    num_tiles = _cdiv(B, TB)
    vmem_limit = int(min(max(2 * vmem_estimate(TB), 32 * (1 << 20)), 48 * (1 << 20)))

    # --- cost estimate (helps XLA schedule around the custom call) -----------
    flops = 0
    transcendentals = 0
    for l in range(num_layers):
        in_d, out_d = flat[2 * l].shape
        flops += 2 * B * in_d * out_d
        if activations[l] == "tanh":
            transcendentals += B * out_d
    bytes_accessed = (x.size * isize(x.dtype)
                      + B * D_out * isize(out_dtype)
                      + sum(a.size * isize(a.dtype) for a in flat))
    cost = pl.CostEstimate(flops=int(flops),
                           transcendentals=int(transcendentals),
                           bytes_accessed=int(bytes_accessed))

    kernel = functools.partial(_fused_mlp_kernel, activations=activations)

    def build(single_buffer_weights):
        # Weight-stationary: weights/biases always map to block (0, 0) so they
        # are fetched once and stay resident; only x / out are streamed.
        wkw = {"pipeline_mode": pl.Buffered(1)} if single_buffer_weights else {}
        in_specs = [pl.BlockSpec((TB, D_in), lambda i: (i, 0))]
        for l in range(num_layers):
            in_specs.append(pl.BlockSpec(flat[2 * l].shape, lambda i: (0, 0), **wkw))
            in_specs.append(pl.BlockSpec(flat[2 * l + 1].shape, lambda i: (0, 0), **wkw))
        return pl.pallas_call(
            kernel,
            out_shape=jax.ShapeDtypeStruct((B, D_out), out_dtype),
            grid=(num_tiles,),
            in_specs=in_specs,
            out_specs=pl.BlockSpec((TB, D_out), lambda i: (i, 0)),
            compiler_params=pltpu.CompilerParams(
                dimension_semantics=("parallel",),   # shard batch tiles across TCs
                vmem_limit_bytes=vmem_limit,
            ),
            cost_estimate=cost,
        )

    if _SINGLE_BUFFER_WEIGHTS_OK is None:
        try:
            out = jax.block_until_ready(build(True)(x, *flat))
            _SINGLE_BUFFER_WEIGHTS_OK = True
            return out
        except Exception:
            _SINGLE_BUFFER_WEIGHTS_OK = False
            return build(False)(x, *flat)
    return build(_SINGLE_BUFFER_WEIGHTS_OK)(x, *flat)


# ---------------------------------------------------------------------------
# Parameter init (xavier_normal weights, constant bias) and plain-JAX reference.
# ---------------------------------------------------------------------------
def init_mlp_params(key, initial_input_dim, output_dims, bias_value=0.0):
    """Xavier-normal weights (deterministic via PRNGKey), constant bias.
    Weights stored (D_in, D_out), i.e. transposed vs PyTorch nn.Linear."""
    dims = [initial_input_dim] + list(output_dims)
    params = []
    for i in range(len(dims) - 1):
        key, wk = jax.random.split(key)
        fan_in, fan_out = dims[i], dims[i + 1]
        std = (2.0 / (fan_in + fan_out)) ** 0.5  # xavier_normal, gain=1
        w = jax.random.normal(wk, (fan_in, fan_out), dtype=jnp.float32) * std
        b = jnp.full((fan_out,), bias_value, dtype=jnp.float32)
        params.append((w, b))
    return params


def mlp_reference(x, params, activations, compute_dtype=jnp.float32):
    """Plain-JAX reference (eval-mode dropout = identity).  `compute_dtype`
    mimics the kernel's storage/compute dtype (f32 accumulation either way)."""
    h = x
    for (w, b), act in zip(params, activations):
        h = jnp.dot(h.astype(compute_dtype), w.astype(compute_dtype),
                    preferred_element_type=jnp.float32) + b.astype(jnp.float32)
        if act == "relu":
            h = jnp.maximum(h, 0.0)
        elif act == "tanh":
            h = jnp.tanh(h)
    return h


if __name__ == "__main__":
    key = jax.random.PRNGKey(0)

    # Config 1: MLP(initial_input_dim=32, output_dims=[64, 32, 16],
    #               activations=[relu, relu, identity], dropout eval mode),
    # bf16 parameter storage (fast path).
    key, xk = jax.random.split(key)
    batch, d_in, out_dims = 8, 32, [64, 32, 16]
    acts = ["relu", "relu", "identity"]
    x = jax.random.normal(xk, (batch, d_in), dtype=jnp.float32)
    params = init_mlp_params(key, d_in, out_dims, bias_value=0.0)
    prepared = prepare_mlp_params(params, acts, param_dtype=jnp.bfloat16)

    out = jax.block_until_ready(mlp_forward(x, prepared))
    ref = mlp_reference(x, params, acts, compute_dtype=jnp.bfloat16)
    assert out.shape == (batch, out_dims[-1])
    assert jnp.allclose(out, ref, atol=2e-2, rtol=2e-2), "mismatch vs reference (cfg1 bf16)"

    # Config 2: odd batch (partial last tile), 2 grid steps (megacore path),
    # tanh, non-zero bias, exact f32 parameter storage.
    key2 = jax.random.PRNGKey(1)
    key2, xk2 = jax.random.split(key2)
    batch2, d_in2, dims2 = 20, 24, [40, 12]
    acts2 = ["tanh", "relu"]
    x2 = jax.random.normal(xk2, (batch2, d_in2), dtype=jnp.float32)
    params2 = init_mlp_params(key2, d_in2, dims2, bias_value=0.1)
    prepared2 = prepare_mlp_params(params2, acts2, param_dtype=jnp.float32)

    out2 = jax.block_until_ready(mlp_forward(x2, prepared2))
    ref2 = mlp_reference(x2, params2, acts2, compute_dtype=jnp.float32)
    assert out2.shape == (batch2, dims2[-1])
    assert jnp.allclose(out2, ref2, atol=1e-4, rtol=1e-4), "mismatch vs reference (cfg2 f32)"

    print("KERNEL_OK")
</pallas_src>

<mosaic_0001>
module attributes {stable_mosaic.version = 11 : i64} {
  func.func @_fused_mlp_kernel(%arg0: i32, %arg1: memref<8x32xf32, #tpu.memory_space<vmem>>, %arg2: memref<32x128xbf16, #tpu.memory_space<vmem>>, %arg3: memref<1x128xf32, #tpu.memory_space<vmem>>, %arg4: memref<128x128xbf16, #tpu.memory_space<vmem>>, %arg5: memref<1x128xf32, #tpu.memory_space<vmem>>, %arg6: memref<128x16xbf16, #tpu.memory_space<vmem>>, %arg7: memref<1x16xf32, #tpu.memory_space<vmem>>, %arg8: memref<8x16xf32, #tpu.memory_space<vmem>>) attributes {dimension_semantics = [#tpu.dimension_semantics<parallel>], iteration_bounds = array<i64: 1>, scalar_prefetch = 0 : i64, scratch_operands = 0 : i64, tpu.core_type = #tpu.core_type<tc>, window_params = [{transform_indices = @transform_0, window_bounds = array<i64: 8, 32>}, {pipeline_mode = #tpu.pipeline_mode<synchronous>, transform_indices = @transform_1, window_bounds = array<i64: 32, 128>}, {pipeline_mode = #tpu.pipeline_mode<synchronous>, transform_indices = @transform_2, window_bounds = array<i64: 1, 128>}, {pipeline_mode = #tpu.pipeline_mode<synchronous>, transform_indices = @transform_3, window_bounds = array<i64: 128, 128>}, {pipeline_mode = #tpu.pipeline_mode<synchronous>, transform_indices = @transform_4, window_bounds = array<i64: 1, 128>}, {pipeline_mode = #tpu.pipeline_mode<synchronous>, transform_indices = @transform_5, window_bounds = array<i64: 128, 16>}, {pipeline_mode = #tpu.pipeline_mode<synchronous>, transform_indices = @transform_6, window_bounds = array<i64: 1, 16>}, {transform_indices = @transform_7, window_bounds = array<i64: 8, 16>}]} {
    %c0 = arith.constant 0 : index
    %c0_0 = arith.constant 0 : index
    %0 = vector.load %arg1[%c0, %c0_0] : memref<8x32xf32, #tpu.memory_space<vmem>>, vector<8x32xf32>
    %c0_1 = arith.constant 0 : index
    %c0_2 = arith.constant 0 : index
    %1 = vector.load %arg2[%c0_1, %c0_2] : memref<32x128xbf16, #tpu.memory_space<vmem>>, vector<32x128xbf16>
    %c0_3 = arith.constant 0 : index
    %c0_4 = arith.constant 0 : index
    %2 = vector.load %arg3[%c0_3, %c0_4] : memref<1x128xf32, #tpu.memory_space<vmem>>, vector<1x128xf32>
    %3 = arith.truncf %0 : vector<8x32xf32> to vector<8x32xbf16>
    %cst = arith.constant dense<0.000000e+00> : vector<8x128xf32>
    %4 = tpu.matmul %3, %1, %cst {dimension_numbers = #tpu.dot_dimension_numbers<[1], [0], [0], [1], [0, 0, 1, 1], [], []>} : vector<8x32xbf16>, vector<32x128xbf16>, vector<8x128xf32> -> vector<8x128xf32>
    %5 = vector.broadcast %2 : vector<1x128xf32> to vector<8x128xf32>
    %6 = arith.addf %4, %5 : vector<8x128xf32>
    %cst_5 = arith.constant 0.000000e+00 : f32
    %7 = vector.broadcast %cst_5 : f32 to vector<8x128xf32>
    %8 = arith.maximumf %6, %7 : vector<8x128xf32>
    %c0_6 = arith.constant 0 : index
    %c0_7 = arith.constant 0 : index
    %9 = vector.load %arg4[%c0_6, %c0_7] : memref<128x128xbf16, #tpu.memory_space<vmem>>, vector<128x128xbf16>
    %c0_8 = arith.constant 0 : index
    %c0_9 = arith.constant 0 : index
    %10 = vector.load %arg5[%c0_8, %c0_9] : memref<1x128xf32, #tpu.memory_space<vmem>>, vector<1x128xf32>
    %11 = arith.truncf %8 : vector<8x128xf32> to vector<8x128xbf16>
    %cst_10 = arith.constant dense<0.000000e+00> : vector<8x128xf32>
    %12 = tpu.matmul %11, %9, %cst_10 {dimension_numbers = #tpu.dot_dimension_numbers<[1], [0], [0], [1], [0, 0, 1, 1], [], []>} : vector<8x128xbf16>, vector<128x128xbf16>, vector<8x128xf32> -> vector<8x128xf32>
    %13 = vector.broadcast %10 : vector<1x128xf32> to vector<8x128xf32>
    %14 = arith.addf %12, %13 : vector<8x128xf32>
    %cst_11 = arith.constant 0.000000e+00 : f32
    %15 = vector.broadcast %cst_11 : f32 to vector<8x128xf32>
    %16 = arith.maximumf %14, %15 : vector<8x128xf32>
    %c0_12 = arith.constant 0 : index
    %c0_13 = arith.constant 0 : index
    %17 = vector.load %arg6[%c0_12, %c0_13] : memref<128x16xbf16, #tpu.memory_space<vmem>>, vector<128x16xbf16>
    %c0_14 = arith.constant 0 : index
    %c0_15 = arith.constant 0 : index
    %18 = vector.load %arg7[%c0_14, %c0_15] : memref<1x16xf32, #tpu.memory_space<vmem>>, vector<1x16xf32>
    %19 = arith.truncf %16 : vector<8x128xf32> to vector<8x128xbf16>
    %cst_16 = arith.constant dense<0.000000e+00> : vector<8x16xf32>
    %20 = tpu.matmul %19, %17, %cst_16 {dimension_numbers = #tpu.dot_dimension_numbers<[1], [0], [0], [1], [0, 0, 1, 1], [], []>} : vector<8x128xbf16>, vector<128x16xbf16>, vector<8x16xf32> -> vector<8x16xf32>
    %21 = vector.broadcast %18 : vector<1x16xf32> to vector<8x16xf32>
    %22 = arith.addf %20, %21 : vector<8x16xf32>
    %c0_17 = arith.constant 0 : index
    %c0_18 = arith.constant 0 : index
    %23 = vector.load %arg8[%c0_17, %c0_18] : memref<8x16xf32, #tpu.memory_space<vmem>>, vector<8x16xf32>
    tpu.vector_store %arg8[%c0_17, %c0_18], %22 {strides = array<i32>} : memref<8x16xf32, #tpu.memory_space<vmem>>, vector<8x16xf32>,
    return
  }
  func.func @transform_0(%arg0: i32) -> (i32, i32) {
    %c0_i32 = arith.constant 0 : i32
    %c0_i32_0 = arith.constant 0 : i32
    return %arg0, %c0_i32 : i32, i32
  }
  func.func @transform_1(%arg0: i32) -> (i32, i32) {
    %c0_i32 = arith.constant 0 : i32
    %c0_i32_0 = arith.constant 0 : i32
    %c0_i32_1 = arith.constant 0 : i32
    return %c0_i32, %c0_i32_0 : i32, i32
  }
  func.func @transform_2(%arg0: i32) -> (i32, i32) {
    %c0_i32 = arith.constant 0 : i32
    %c0_i32_0 = arith.constant 0 : i32
    %c0_i32_1 = arith.constant 0 : i32
    return %c0_i32, %c0_i32_0 : i32, i32
  }
  func.func @transform_3(%arg0: i32) -> (i32, i32) {
    %c0_i32 = arith.constant 0 : i32
    %c0_i32_0 = arith.constant 0 : i32
    %c0_i32_1 = arith.constant 0 : i32
    return %c0_i32, %c0_i32_0 : i32, i32
  }
  func.func @transform_4(%arg0: i32) -> (i32, i32) {
    %c0_i32 = arith.constant 0 : i32
    %c0_i32_0 = arith.constant 0 : i32
    %c0_i32_1 = arith.constant 0 : i32
    return %c0_i32, %c0_i32_0 : i32, i32
  }
  func.func @transform_5(%arg0: i32) -> (i32, i32) {
    %c0_i32 = arith.constant 0 : i32
    %c0_i32_0 = arith.constant 0 : i32
    %c0_i32_1 = arith.constant 0 : i32
    return %c0_i32, %c0_i32_0 : i32, i32
  }
  func.func @transform_6(%arg0: i32) -> (i32, i32) {
    %c0_i32 = arith.constant 0 : i32
    %c0_i32_0 = arith.constant 0 : i32
    %c0_i32_1 = arith.constant 0 : i32
    return %c0_i32, %c0_i32_0 : i32, i32
  }
  func.func @transform_7(%arg0: i32) -> (i32, i32) {
    %c0_i32 = arith.constant 0 : i32
    %c0_i32_0 = arith.constant 0 : i32
    return %arg0, %c0_i32 : i32, i32
  }
}

module attributes {stable_mosaic.version = 11 : i64} {
  func.func @_fused_mlp_kernel(%arg0: i32, %arg1: memref<8x32xf32, #tpu.memory_space<vmem>>, %arg2: memref<32x128xbf16, #tpu.memory_space<vmem>>, %arg3: memref<1x128xf32, #tpu.memory_space<vmem>>, %arg4: memref<128x128xbf16, #tpu.memory_space<vmem>>, %arg5: memref<1x128xf32, #tpu.memory_space<vmem>>, %arg6: memref<128x16xbf16, #tpu.memory_space<vmem>>, %arg7: memref<1x16xf32, #tpu.memory_space<vmem>>, %arg8: memref<8x16xf32, #tpu.memory_space<vmem>>) attributes {dimension_semantics = [#tpu.dimension_semantics<parallel>], iteration_bounds = array<i64: 1>, scalar_prefetch = 0 : i64, scratch_operands = 0 : i64, tpu.core_type = #tpu.core_type<tc>, window_params = [{transform_indices = @transform_0, window_bounds = array<i64: 8, 32>}, {pipeline_mode = #tpu.pipeline_mode<synchronous>, transform_indices = @transform_1, window_bounds = array<i64: 32, 128>}, {pipeline_mode = #tpu.pipeline_mode<synchronous>, transform_indices = @transform_2, window_bounds = array<i64: 1, 128>}, {pipeline_mode = #tpu.pipeline_mode<synchronous>, transform_indices = @transform_3, window_bounds = array<i64: 128, 128>}, {pipeline_mode = #tpu.pipeline_mode<synchronous>, transform_indices = @transform_4, window_bounds = array<i64: 1, 128>}, {pipeline_mode = #tpu.pipeline_mode<synchronous>, transform_indices = @transform_5, window_bounds = array<i64: 128, 16>}, {pipeline_mode = #tpu.pipeline_mode<synchronous>, transform_indices = @transform_6, window_bounds = array<i64: 1, 16>}, {transform_indices = @transform_7, window_bounds = array<i64: 8, 16>}]} {
    %c0 = arith.constant 0 : index
    %c0_0 = arith.constant 0 : index
    %0 = vector.load %arg1[%c0, %c0_0] : memref<8x32xf32, #tpu.memory_space<vmem>>, vector<8x32xf32>
    %c0_1 = arith.constant 0 : index
    %c0_2 = arith.constant 0 : index
    %1 = vector.load %arg2[%c0_1, %c0_2] : memref<32x128xbf16, #tpu.memory_space<vmem>>, vector<32x128xbf16>
    %c0_3 = arith.constant 0 : index
    %c0_4 = arith.constant 0 : index
    %2 = vector.load %arg3[%c0_3, %c0_4] : memref<1x128xf32, #tpu.memory_space<vmem>>, vector<1x128xf32>
    %3 = arith.truncf %0 : vector<8x32xf32> to vector<8x32xbf16>
    %cst = arith.constant dense<0.000000e+00> : vector<8x128xf32>
    %4 = tpu.matmul %3, %1, %cst {dimension_numbers = #tpu.dot_dimension_numbers<[1], [0], [0], [1], [0, 0, 1, 1], [], []>} : vector<8x32xbf16>, vector<32x128xbf16>, vector<8x128xf32> -> vector<8x128xf32>
    %5 = vector.broadcast %2 : vector<1x128xf32> to vector<8x128xf32>
    %6 = arith.addf %4, %5 : vector<8x128xf32>
    %cst_5 = arith.constant 0.000000e+00 : f32
    %7 = vector.broadcast %cst_5 : f32 to vector<8x128xf32>
    %8 = arith.maximumf %6, %7 : vector<8x128xf32>
    %c0_6 = arith.constant 0 : index
    %c0_7 = arith.constant 0 : index
    %9 = vector.load %arg4[%c0_6, %c0_7] : memref<128x128xbf16, #tpu.memory_space<vmem>>, vector<128x128xbf16>
    %c0_8 = arith.constant 0 : index
    %c0_9 = arith.constant 0 : index
    %10 = vector.load %arg5[%c0_8, %c0_9] : memref<1x128xf32, #tpu.memory_space<vmem>>, vector<1x128xf32>
    %11 = arith.truncf %8 : vector<8x128xf32> to vector<8x128xbf16>
    %cst_10 = arith.constant dense<0.000000e+00> : vector<8x128xf32>
    %12 = tpu.matmul %11, %9, %cst_10 {dimension_numbers = #tpu.dot_dimension_numbers<[1], [0], [0], [1], [0, 0, 1, 1], [], []>} : vector<8x128xbf16>, vector<128x128xbf16>, vector<8x128xf32> -> vector<8x128xf32>
    %13 = vector.broadcast %10 : vector<1x128xf32> to vector<8x128xf32>
    %14 = arith.addf %12, %13 : vector<8x128xf32>
    %cst_11 = arith.constant 0.000000e+00 : f32
    %15 = vector.broadcast %cst_11 : f32 to vector<8x128xf32>
    %16 = arith.maximumf %14, %15 : vector<8x128xf32>
    %c0_12 = arith.constant 0 : index
    %c0_13 = arith.constant 0 : index
    %17 = vector.load %arg6[%c0_12, %c0_13] : memref<128x16xbf16, #tpu.memory_space<vmem>>, vector<128x16xbf16>
    %c0_14 = arith.constant 0 : index
    %c0_15 = arith.constant 0 : index
    %18 = vector.load %arg7[%c0_14, %c0_15] : memref<1x16xf32, #tpu.memory_space<vmem>>, vector<1x16xf32>
    %19 = arith.truncf %16 : vector<8x128xf32> to vector<8x128xbf16>
    %cst_16 = arith.constant dense<0.000000e+00> : vector<8x16xf32>
    %20 = tpu.matmul %19, %17, %cst_16 {dimension_numbers = #tpu.dot_dimension_numbers<[1], [0], [0], [1], [0, 0, 1, 1], [], []>} : vector<8x128xbf16>, vector<128x16xbf16>, vector<8x16xf32> -> vector<8x16xf32>
    %21 = vector.broadcast %18 : vector<1x16xf32> to vector<8x16xf32>
    %22 = arith.addf %20, %21 : vector<8x16xf32>
    %c0_17 = arith.constant 0 : index
    %c0_18 = arith.constant 0 : index
    %23 = vector.load %arg8[%c0_17, %c0_18] : memref<8x16xf32, #tpu.memory_space<vmem>>, vector<8x16xf32>
    tpu.vector_store %arg8[%c0_17, %c0_18], %22 {strides = array<i32>} : memref<8x16xf32, #tpu.memory_space<vmem>>, vector<8x16xf32>,
    return
  }
  func.func @transform_0(%arg0: i32) -> (i32, i32) {
    %c0_i32 = arith.constant 0 : i32
    %c0_i32_0 = arith.constant 0 : i32
    return %arg0, %c0_i32 : i32, i32
  }
  func.func @transform_1(%arg0: i32) -> (i32, i32) {
    %c0_i32 = arith.constant 0 : i32
    %c0_i32_0 = arith.constant 0 : i32
    %c0_i32_1 = arith.constant 0 : i32
    return %c0_i32, %c0_i32_0 : i32, i32
  }
  func.func @transform_2(%arg0: i32) -> (i32, i32) {
    %c0_i32 = arith.constant 0 : i32
    %c0_i32_0 = arith.constant 0 : i32
    %c0_i32_1 = arith.constant 0 : i32
    return %c0_i32, %c0_i32_0 : i32, i32
  }
  func.func @transform_3(%arg0: i32) -> (i32, i32) {
    %c0_i32 = arith.constant 0 : i32
    %c0_i32_0 = arith.constant 0 : i32
    %c0_i32_1 = arith.constant 0 : i32
    return %c0_i32, %c0_i32_0 : i32, i32
  }
  func.func @transform_4(%arg0: i32) -> (i32, i32) {
    %c0_i32 = arith.constant 0 : i32
    %c0_i32_0 = arith.constant 0 : i32
    %c0_i32_1 = arith.constant 0 : i32
    return %c0_i32, %c0_i32_0 : i32, i32
  }
  func.func @transform_5(%arg0: i32) -> (i32, i32) {
    %c0_i32 = arith.constant 0 : i32
    %c0_i32_0 = arith.constant 0 : i32
    %c0_i32_1 = arith.constant 0 : i32
    return %c0_i32, %c0_i32_0 : i32, i32
  }
  func.func @transform_6(%arg0: i32) -> (i32, i32) {
    %c0_i32 = arith.constant 0 : i32
    %c0_i32_0 = arith.constant 0 : i32
    %c0_i32_1 = arith.constant 0 : i32
    return %c0_i32, %c0_i32_0 : i32, i32
  }
  func.func @transform_7(%arg0: i32) -> (i32, i32) {
    %c0_i32 = arith.constant 0 : i32
    %c0_i32_0 = arith.constant 0 : i32
    return %arg0, %c0_i32 : i32, i32
  }
}

</mosaic_0001>

<llo_original>
// kernel: tpu_custom_call.1
$region0: #{tpu_custom_call.1}
  #allocation0 [shape = 'u32[]', space=smem, size = 0x4, offset = 0x4, fixed_abs, tag = 'smem constant byte address 0x4 - core index']
  #allocation1 [shape = 'u32[144,128]{1,0:T(1,128)}', space=vmem, size = 0x12000, scoped, tag = 'internal scratch']
  %s0 = inlined_call_operand.hbm [shape: f32[8,32], index: 0, kind: input, shape index: {}]
  %s1 = inlined_call_operand.vmem [shape: bf16[32,128], index: 1, kind: input, shape index: {}]
  %s2 = inlined_call_operand.vmem [shape: f32[1,128], index: 2, kind: input, shape index: {}]
  %s3 = inlined_call_operand.vmem [shape: bf16[128,128], index: 3, kind: input, shape index: {}]
  %s4 = inlined_call_operand.vmem [shape: f32[1,128], index: 4, kind: input, shape index: {}]
  %s5 = inlined_call_operand.vmem [shape: bf16[128,16], index: 5, kind: input, shape index: {}]
  %s6 = inlined_call_operand.vmem [shape: f32[1,16], index: 6, kind: input, shape index: {}]
  %s7 = inlined_call_operand.hbm [shape: f32[8,16], index: 7, kind: output, shape index: {}]
  %s8 = sld [smem:[#allocation0]]
  $region42: #{tpu_custom_call.1} parent=0
    _
  %s10 = ssub.s32 1, %s8
  %s11 = scalar_select 0, %s10, %s8
  $region1: #{tpu_custom_call.1} parent=0
    #allocation2 [shape = 'u8[4096]{0}', space=vmem, size = 0x1000, scoped, tag = 'input window, operand 0, single buffered']
    #allocation3 [shape = 's32[1]{0}', space=sflag, size = 0x4, scoped, tag = 'scoped memory for tpu_custom_call.1']
    #allocation4 [shape = 's32[1]{0}', space=sflag, size = 0x4, scoped, tag = 'scoped memory for tpu_custom_call.1']
    #allocation5 [shape = 'u8[4096]{0}', space=vmem, size = 0x1000, scoped, tag = 'output window, operand 0, single buffered']
    %12 = vsyncpa [#allocation3], 0
    %13 = vsyncpa [#allocation4], 0
    // Predicated region
    $region2: #{tpu_custom_call.1} parent=1 // pred_check
      _
    $region3: #{tpu_custom_call.1} parent=1 // pred_check_branch
      %15 = sbr.rel (0) target = $region5
    $region4: #{tpu_custom_call.1} parent=1 // pred_region
      %s17 = ssub.s32 128, 128
      %18 = vsyncadd [#allocation3], %s17
      %s20 = sshll.u32 [#allocation2], 4
      %s21 = int_to_ptr.vmem [resolvable:$true] %s20
      %23 = dma.hbm_to_vmem [thread:$0]  %s0, 128, %s21, [#allocation3]
    $region5: #{tpu_custom_call.1} parent=1 // pred_fallthru
      _
    // Predicated region
    $region6: #{tpu_custom_call.1} parent=1 // pred_check
      _
    $region7: #{tpu_custom_call.1} parent=1 // pred_check_branch
      %25 = sbr.rel (0) target = $region9
    $region8: #{tpu_custom_call.1} parent=1 // pred_region
      _
    $region9: #{tpu_custom_call.1} parent=1 // pred_fallthru
      _
    // Predicated region
    $region10: #{tpu_custom_call.1} parent=1 // pred_check
      _
    $region11: #{tpu_custom_call.1} parent=1 // pred_check_branch
      %27 = sbr.rel (0) target = $region13
    $region12: #{tpu_custom_call.1} parent=1 // pred_region
      _
    $region13: #{tpu_custom_call.1} parent=1 // pred_fallthru
      _
    // Predicated region
    $region14: #{tpu_custom_call.1} parent=1 // pred_check
      _
    $region15: #{tpu_custom_call.1} parent=1 // pred_check_branch
      %29 = sbr.rel (0) target = $region17
    $region16: #{tpu_custom_call.1} parent=1 // pred_region
      _
    $region17: #{tpu_custom_call.1} parent=1 // pred_fallthru
      _
    // Predicated region
    $region18: #{tpu_custom_call.1} parent=1 // pred_check
      _
    $region19: #{tpu_custom_call.1} parent=1 // pred_check_branch
      %31 = sbr.rel (0) target = $region21
    $region20: #{tpu_custom_call.1} parent=1 // pred_region
      _
    $region21: #{tpu_custom_call.1} parent=1 // pred_fallthru
      _
    // Predicated region
    $region22: #{tpu_custom_call.1} parent=1 // pred_check
      _
    $region23: #{tpu_custom_call.1} parent=1 // pred_check_branch
      %33 = sbr.rel (0) target = $region25
    $region24: #{tpu_custom_call.1} parent=1 // pred_region
      _
    $region25: #{tpu_custom_call.1} parent=1 // pred_fallthru
      _
    // Predicated region
    $region26: #{tpu_custom_call.1} parent=1 // pred_check
      _
    $region27: #{tpu_custom_call.1} parent=1 // pred_check_branch
      %35 = sbr.rel (0) target = $region29
    $region28: #{tpu_custom_call.1} parent=1 // pred_region
      _
    $region29: #{tpu_custom_call.1} parent=1 // pred_fallthru
      _
    // Predicated region
    $region30: #{tpu_custom_call.1} parent=1 // pred_check
      _
    $region31: #{tpu_custom_call.1} parent=1 // pred_check_branch
      %37 = sbr.rel (0) target = $region33
    $region32: #{tpu_custom_call.1} parent=1 // pred_region
      %38 = dma.done [#allocation3], 128
    $region33: #{tpu_custom_call.1} parent=1 // pred_fallthru
      _
    %v40 = vld [vmem:[#allocation2] sm:$0xff]
    %v41 = vld [vmem:[%s1] sm:$0xf]
    %v42 = vld [vmem:[%s1 + $0x4] sm:$0xf]
    %v43 = vld [vmem:[%s1 + $0x8] sm:$0xf]
    %v44 = vld [vmem:[%s1 + $0xc] sm:$0xf]
    %v45 = vld [vmem:[%s2] sm:$0x1]
    %v46 = vpack.c.bf16 %v40, %v40
    %v48 = vlaneseq
    %v49 = vshrl.u32 %v48, 7
    %v50 = vsub.s32 0, %v49
    %v51 = vrot.slane %v45, %v50
    %v57 = vunpack.c.l.b16 %v41
    %v58 = vunpack.c.l.b16 %v42
    %v59 = vunpack.c.l.b16 %v43
    %v60 = vunpack.c.l.b16 %v44
    %v61 = vpack.c.b16 %v58, %v57
    %v62 = vpack.c.b16 %v60, %v59
    %vm65 = vcmask 261120
    %v67 = vsel %vm65, %v46, 0
    %69 = vmatprep.subr.bf16.mxu0 0
    %70 = vmatpush1.bf16.msra.mxu0 %v61
    %71 = vmatprep.subr.bf16.mxu0 0
    %72 = vmatpush1.bf16.msra.mxu0 %v62
    %73 = vmatprep.subr.bf16.mxu0 0
    %74 = vmatpush1.bf16.msra.mxu0 0
    %75 = vmatprep.subr.bf16.mxu0 0
    %76 = vmatpush1.bf16.msra.mxu0 0
    %77 = vmatprep.subr.bf16.mxu0 0
    %78 = vmatpush1.bf16.msra.mxu0 0
    %79 = vmatprep.subr.bf16.mxu0 0
    %80 = vmatpush1.bf16.msra.mxu0 0
    %81 = vmatprep.subr.bf16.mxu0 0
    %82 = vmatpush1.bf16.msra.mxu0 0
    %83 = vmatprep.subr.bf16.mxu0 0
    %84 = vmatpush1.bf16.msra.mxu0 0
    %85 = vmatprep.subr.bf16.mxu0 0
    %86 = vmatpush1.bf16.msra.mxu0 0
    %87 = vmatprep.subr.bf16.mxu0 0
    %88 = vmatpush1.bf16.msra.mxu0 0
    %89 = vmatprep.subr.bf16.mxu0 0
    %90 = vmatpush1.bf16.msra.mxu0 0
    %91 = vmatprep.subr.bf16.mxu0 0
    %92 = vmatpush1.bf16.msra.mxu0 0
    %93 = vmatprep.subr.bf16.mxu0 0
    %94 = vmatpush1.bf16.msra.mxu0 0
    %95 = vmatprep.subr.bf16.mxu0 0
    %96 = vmatpush1.bf16.msra.mxu0 0
    %97 = vmatprep.subr.bf16.mxu0 0
    %98 = vmatpush1.bf16.msra.mxu0 0
    %99 = vmatprep.subr.bf16.mxu0 0
    %100 = vmatpush1.bf16.msra.mxu0 0
    %101 = vmatprep.mubr.bf16.mxu0 0
    %102 = vmatmul.mubr.bf16.gmra.mrb[0].mxu0 %v67
    %v103 = vpop.f32.mrb[0].mxu0
    %v104 = vadd.f32 %v51, %v103
    %v105 = vpop.f32.mrb[0].mxu0
    %v106 = vpop.f32.mrb[0].mxu0
    %v107 = vpop.f32.mrb[0].mxu0
    %108 = vdwg.mxu0
    %v109 = vmax.f32 %v104, 0.0
    %v110 = vld [vmem:[%s3] sm:$0xf]
    %v111 = vld [vmem:[%s3 + $0x4] sm:$0xf]
    %v112 = vld [vmem:[%s3 + $0x8] sm:$0xf]
    %v113 = vld [vmem:[%s3 + $0xc] sm:$0xf]
    %v114 = vld [vmem:[%s3 + $0x10] sm:$0xf]
    %v115 = vld [vmem:[%s3 + $0x14] sm:$0xf]
    %v116 = vld [vmem:[%s3 + $0x18] sm:$0xf]
    %v117 = vld [vmem:[%s3 + $0x1c] sm:$0xf]
    %v118 = vld [vmem:[%s3 + $0x20] sm:$0xf]
    %v119 = vld [vmem:[%s3 + $0x24] sm:$0xf]
    %v120 = vld [vmem:[%s3 + $0x28] sm:$0xf]
    %v121 = vld [vmem:[%s3 + $0x2c] sm:$0xf]
    %v122 = vld [vmem:[%s3 + $0x30] sm:$0xf]
    %v123 = vld [vmem:[%s3 + $0x34] sm:$0xf]
    %v124 = vld [vmem:[%s3 + $0x38] sm:$0xf]
    %v125 = vld [vmem:[%s3 + $0x3c] sm:$0xf]
    %v126 = vld [vmem:[%s4] sm:$0x1]
    %v127 = vpack.c.bf16 %v109, %v109
    %v129 = vlaneseq
    %v130 = vshrl.u32 %v129, 7
    %v131 = vsub.s32 0, %v130
    %v132 = vrot.slane %v126, %v131
    %v150 = vunpack.c.l.b16 %v110
    %v151 = vunpack.c.l.b16 %v111
    %v152 = vunpack.c.l.b16 %v112
    %v153 = vunpack.c.l.b16 %v113
    %v154 = vunpack.c.l.b16 %v114
    %v155 = vunpack.c.l.b16 %v115
    %v156 = vunpack.c.l.b16 %v116
    %v157 = vunpack.c.l.b16 %v117
    %v158 = vunpack.c.l.b16 %v118
    %v159 = vunpack.c.l.b16 %v119
    %v160 = vunpack.c.l.b16 %v120
    %v161 = vunpack.c.l.b16 %v121
    %v162 = vunpack.c.l.b16 %v122
    %v163 = vunpack.c.l.b16 %v123
    %v164 = vunpack.c.l.b16 %v124
    %v165 = vunpack.c.l.b16 %v125
    %v166 = vpack.c.b16 %v151, %v150
    %v167 = vpack.c.b16 %v153, %v152
    %v168 = vpack.c.b16 %v155, %v154
    %v169 = vpack.c.b16 %v157, %v156
    %v170 = vpack.c.b16 %v159, %v158
    %v171 = vpack.c.b16 %v161, %v160
    %v172 = vpack.c.b16 %v163, %v162
    %v173 = vpack.c.b16 %v165, %v164
    %182 = vmatprep.subr.bf16.mxu0 0
    %183 = vmatpush1.bf16.msra.mxu0 %v166
    %184 = vmatprep.subr.bf16.mxu0 0
    %185 = vmatpush1.bf16.msra.mxu0 %v167
    %186 = vmatprep.subr.bf16.mxu0 0
    %187 = vmatpush1.bf16.msra.mxu0 %v168
    %188 = vmatprep.subr.bf16.mxu0 0
    %189 = vmatpush1.bf16.msra.mxu0 %v169
    %190 = vmatprep.subr.bf16.mxu0 0
    %191 = vmatpush1.bf16.msra.mxu0 %v170
    %192 = vmatprep.subr.bf16.mxu0 0
    %193 = vmatpush1.bf16.msra.mxu0 %v171
    %194 = vmatprep.subr.bf16.mxu0 0
    %195 = vmatpush1.bf16.msra.mxu0 %v172
    %196 = vmatprep.subr.bf16.mxu0 0
    %197 = vmatpush1.bf16.msra.mxu0 %v173
    %198 = vmatprep.subr.bf16.mxu0 0
    %199 = vmatpush1.bf16.msra.mxu0 0
    %200 = vmatprep.subr.bf16.mxu0 0
    %201 = vmatpush1.bf16.msra.mxu0 0
    %202 = vmatprep.subr.bf16.mxu0 0
    %203 = vmatpush1.bf16.msra.mxu0 0
    %204 = vmatprep.subr.bf16.mxu0 0
    %205 = vmatpush1.bf16.msra.mxu0 0
    %206 = vmatprep.subr.bf16.mxu0 0
    %207 = vmatpush1.bf16.msra.mxu0 0
    %208 = vmatprep.subr.bf16.mxu0 0
    %209 = vmatpush1.bf16.msra.mxu0 0
    %210 = vmatprep.subr.bf16.mxu0 0
    %211 = vmatpush1.bf16.msra.mxu0 0
    %212 = vmatprep.subr.bf16.mxu0 0
    %213 = vmatpush1.bf16.msra.mxu0 0
    %214 = vmatprep.mubr.bf16.mxu0 0
    %215 = vmatmul.mubr.bf16.gmra.mrb[0].mxu0 %v127
    %v216 = vpop.f32.mrb[0].mxu0
    %v217 = vadd.f32 %v132, %v216
    %v218 = vpop.f32.mrb[0].mxu0
    %v219 = vpop.f32.mrb[0].mxu0
    %v220 = vpop.f32.mrb[0].mxu0
    %221 = vdwg.mxu0
    %v222 = vmax.f32 %v217, 0.0
    %v223 = vld [vmem:[%s5] sm:$0xf]
    %v224 = vld [vmem:[%s5 + $0x4] sm:$0xf]
    %v225 = vld [vmem:[%s5 + $0x8] sm:$0xf]
    %v226 = vld [vmem:[%s5 + $0xc] sm:$0xf]
    %v227 = vld [vmem:[%s5 + $0x10] sm:$0xf]
    %v228 = vld [vmem:[%s5 + $0x14] sm:$0xf]
    %v229 = vld [vmem:[%s5 + $0x18] sm:$0xf]
    %v230 = vld [vmem:[%s5 + $0x1c] sm:$0xf]
    %v231 = vld [vmem:[%s5 + $0x20] sm:$0xf]
    %v232 = vld [vmem:[%s5 + $0x24] sm:$0xf]
    %v233 = vld [vmem:[%s5 + $0x28] sm:$0xf]
    %v234 = vld [vmem:[%s5 + $0x2c] sm:$0xf]
    %v235 = vld [vmem:[%s5 + $0x30] sm:$0xf]
    %v236 = vld [vmem:[%s5 + $0x34] sm:$0xf]
    %v237 = vld [vmem:[%s5 + $0x38] sm:$0xf]
    %v238 = vld [vmem:[%s5 + $0x3c] sm:$0xf]
    %v239 = vld [vmem:[%s6] sm:$0x1]
    %v240 = vpack.c.bf16 %v222, %v222
    %v242 = vlaneseq
    %v243 = vshrl.u32 %v242, 7
    %v244 = vsub.s32 0, %v243
    %v245 = vrot.slane %v239, %v244
    %v263 = vunpack.c.l.b16 %v223
    %v264 = vunpack.c.l.b16 %v224
    %v265 = vunpack.c.l.b16 %v225
    %v266 = vunpack.c.l.b16 %v226
    %v267 = vunpack.c.l.b16 %v227
    %v268 = vunpack.c.l.b16 %v228
    %v269 = vunpack.c.l.b16 %v229
    %v270 = vunpack.c.l.b16 %v230
    %v271 = vunpack.c.l.b16 %v231
    %v272 = vunpack.c.l.b16 %v232
    %v273 = vunpack.c.l.b16 %v233
    %v274 = vunpack.c.l.b16 %v234
    %v275 = vunpack.c.l.b16 %v235
    %v276 = vunpack.c.l.b16 %v236
    %v277 = vunpack.c.l.b16 %v237
    %v278 = vunpack.c.l.b16 %v238
    %v279 = vpack.c.b16 %v264, %v263
    %v280 = vpack.c.b16 %v266, %v265
    %v281 = vpack.c.b16 %v268, %v267
    %v282 = vpack.c.b16 %v270, %v269
    %v283 = vpack.c.b16 %v272, %v271
    %v284 = vpack.c.b16 %v274, %v273
    %v285 = vpack.c.b16 %v276, %v275
    %v286 = vpack.c.b16 %v278, %v277
    %295 = vmatprep.subr.bf16.mxu0 0
    %296 = vmatpush1.bf16.msra.mxu0 %v279
    %297 = vmatprep.subr.bf16.mxu0 0
    %298 = vmatpush1.bf16.msra.mxu0 %v280
    %299 = vmatprep.subr.bf16.mxu0 0
    %300 = vmatpush1.bf16.msra.mxu0 %v281
    %301 = vmatprep.subr.bf16.mxu0 0
    %302 = vmatpush1.bf16.msra.mxu0 %v282
    %303 = vmatprep.subr.bf16.mxu0 0
    %304 = vmatpush1.bf16.msra.mxu0 %v283
    %305 = vmatprep.subr.bf16.mxu0 0
    %306 = vmatpush1.bf16.msra.mxu0 %v284
    %307 = vmatprep.subr.bf16.mxu0 0
    %308 = vmatpush1.bf16.msra.mxu0 %v285
    %309 = vmatprep.subr.bf16.mxu0 0
    %310 = vmatpush1.bf16.msra.mxu0 %v286
    %311 = vmatprep.subr.bf16.mxu0 0
    %312 = vmatpush1.bf16.msra.mxu0 0
    %313 = vmatprep.subr.bf16.mxu0 0
    %314 = vmatpush1.bf16.msra.mxu0 0
    %315 = vmatprep.subr.bf16.mxu0 0
    %316 = vmatpush1.bf16.msra.mxu0 0
    %317 = vmatprep.subr.bf16.mxu0 0
    %318 = vmatpush1.bf16.msra.mxu0 0
    %319 = vmatprep.subr.bf16.mxu0 0
    %320 = vmatpush1.bf16.msra.mxu0 0
    %321 = vmatprep.subr.bf16.mxu0 0
    %322 = vmatpush1.bf16.msra.mxu0 0
    %323 = vmatprep.subr.bf16.mxu0 0
    %324 = vmatpush1.bf16.msra.mxu0 0
    %325 = vmatprep.subr.bf16.mxu0 0
    %326 = vmatpush1.bf16.msra.mxu0 0
    %327 = vmatprep.mubr.bf16.mxu0 0
    %328 = vmatmul.mubr.bf16.gmra.mrb[0].mxu0 %v240
    %v329 = vpop.f32.mrb[0].mxu0
    %v330 = vadd.f32 %v245, %v329
    %v331 = vpop.f32.mrb[0].mxu0
    %v332 = vpop.f32.mrb[0].mxu0
    %v333 = vpop.f32.mrb[0].mxu0
    %334 = vdwg.mxu0
    %vm335 = vcmask 130048
    %336 = vst.msk [vmem:[#allocation5] sm:$0xff] %vm335, %v330
    // Predicated region
    $region34: #{tpu_custom_call.1} parent=1 // pred_check
      _
    $region35: #{tpu_custom_call.1} parent=1 // pred_check_branch
      %338 = sbr.rel (0) target = $region37
    $region36: #{tpu_custom_call.1} parent=1 // pred_region
      %s340 = ssub.s32 128, 128
      %341 = vsyncadd [#allocation4], %s340
      %s343 = sshll.u32 [#allocation5], 4
      %s344 = int_to_ptr.vmem [resolvable:$true] %s343
      %346 = dma.vmem_to_hbm [thread:$0]  %s344, 128, %s7, [#allocation4]
    $region37: #{tpu_custom_call.1} parent=1 // pred_fallthru
      _
    // Predicated region
    $region38: #{tpu_custom_call.1} parent=1 // pred_check
      _
    $region39: #{tpu_custom_call.1} parent=1 // pred_check_branch
      %348 = sbr.rel (0) target = $region41
    $region40: #{tpu_custom_call.1} parent=1 // pred_region
      %349 = dma.done [#allocation4], 128
    $region41: #{tpu_custom_call.1} parent=1 // pred_fallthru
      _
    %350 = vsyncpa [#allocation3], 1
    %351 = vsyncpa [#allocation4], 1

// kernel: tpu_custom_call.1
$region0: #{tpu_custom_call.1}
  #allocation0 [shape = 'u32[]', space=smem, size = 0x4, offset = 0x4, fixed_abs, tag = 'smem constant byte address 0x4 - core index']
  #allocation1 [shape = 'u32[144,128]{1,0:T(1,128)}', space=vmem, size = 0x12000, scoped, tag = 'internal scratch']
  %s0 = inlined_call_operand.hbm [shape: f32[8,32], index: 0, kind: input, shape index: {}]
  %s1 = inlined_call_operand.vmem [shape: bf16[32,128], index: 1, kind: input, shape index: {}]
  %s2 = inlined_call_operand.vmem [shape: f32[1,128], index: 2, kind: input, shape index: {}]
  %s3 = inlined_call_operand.vmem [shape: bf16[128,128], index: 3, kind: input, shape index: {}]
  %s4 = inlined_call_operand.vmem [shape: f32[1,128], index: 4, kind: input, shape index: {}]
  %s5 = inlined_call_operand.vmem [shape: bf16[128,16], index: 5, kind: input, shape index: {}]
  %s6 = inlined_call_operand.vmem [shape: f32[1,16], index: 6, kind: input, shape index: {}]
  %s7 = inlined_call_operand.hbm [shape: f32[8,16], index: 7, kind: output, shape index: {}]
  %s8 = sld [smem:[#allocation0]]
  $region42: #{tpu_custom_call.1} parent=0
    _
  %s10 = ssub.s32 1, %s8
  %s11 = scalar_select 0, %s10, %s8
  $region1: #{tpu_custom_call.1} parent=0
    #allocation2 [shape = 'u8[4096]{0}', space=vmem, size = 0x1000, scoped, tag = 'input window, operand 0, single buffered']
    #allocation3 [shape = 's32[1]{0}', space=sflag, size = 0x4, scoped, tag = 'scoped memory for tpu_custom_call.1']
    #allocation4 [shape = 's32[1]{0}', space=sflag, size = 0x4, scoped, tag = 'scoped memory for tpu_custom_call.1']
    #allocation5 [shape = 'u8[4096]{0}', space=vmem, size = 0x1000, scoped, tag = 'output window, operand 0, single buffered']
    %12 = vsyncpa [#allocation3], 0
    %13 = vsyncpa [#allocation4], 0
    // Predicated region
    $region2: #{tpu_custom_call.1} parent=1 // pred_check
      _
    $region3: #{tpu_custom_call.1} parent=1 // pred_check_branch
      %15 = sbr.rel (0) target = $region5
    $region4: #{tpu_custom_call.1} parent=1 // pred_region
      %s17 = ssub.s32 128, 128
      %18 = vsyncadd [#allocation3], %s17
      %s20 = sshll.u32 [#allocation2], 4
      %s21 = int_to_ptr.vmem [resolvable:$true] %s20
      %23 = dma.hbm_to_vmem [thread:$0]  %s0, 128, %s21, [#allocation3]
    $region5: #{tpu_custom_call.1} parent=1 // pred_fallthru
      _
    // Predicated region
    $region6: #{tpu_custom_call.1} parent=1 // pred_check
      _
    $region7: #{tpu_custom_call.1} parent=1 // pred_check_branch
      %25 = sbr.rel (0) target = $region9
    $region8: #{tpu_custom_call.1} parent=1 // pred_region
      _
    $region9: #{tpu_custom_call.1} parent=1 // pred_fallthru
      _
    // Predicated region
    $region10: #{tpu_custom_call.1} parent=1 // pred_check
      _
    $region11: #{tpu_custom_call.1} parent=1 // pred_check_branch
      %27 = sbr.rel (0) target = $region13
    $region12: #{tpu_custom_call.1} parent=1 // pred_region
      _
    $region13: #{tpu_custom_call.1} parent=1 // pred_fallthru
      _
    // Predicated region
    $region14: #{tpu_custom_call.1} parent=1 // pred_check
      _
    $region15: #{tpu_custom_call.1} parent=1 // pred_check_branch
      %29 = sbr.rel (0) target = $region17
    $region16: #{tpu_custom_call.1} parent=1 // pred_region
      _
    $region17: #{tpu_custom_call.1} parent=1 // pred_fallthru
      _
    // Predicated region
    $region18: #{tpu_custom_call.1} parent=1 // pred_check
      _
    $region19: #{tpu_custom_call.1} parent=1 // pred_check_branch
      %31 = sbr.rel (0) target = $region21
    $region20: #{tpu_custom_call.1} parent=1 // pred_region
      _
    $region21: #{tpu_custom_call.1} parent=1 // pred_fallthru
      _
    // Predicated region
    $region22: #{tpu_custom_call.1} parent=1 // pred_check
      _
    $region23: #{tpu_custom_call.1} parent=1 // pred_check_branch
      %33 = sbr.rel (0) target = $region25
    $region24: #{tpu_custom_call.1} parent=1 // pred_region
      _
    $region25: #{tpu_custom_call.1} parent=1 // pred_fallthru
      _
    // Predicated region
    $region26: #{tpu_custom_call.1} parent=1 // pred_check
      _
    $region27: #{tpu_custom_call.1} parent=1 // pred_check_branch
      %35 = sbr.rel (0) target = $region29
    $region28: #{tpu_custom_call.1} parent=1 // pred_region
      _
    $region29: #{tpu_custom_call.1} parent=1 // pred_fallthru
      _
    // Predicated region
    $region30: #{tpu_custom_call.1} parent=1 // pred_check
      _
    $region31: #{tpu_custom_call.1} parent=1 // pred_check_branch
      %37 = sbr.rel (0) target = $region33
    $region32: #{tpu_custom_call.1} parent=1 // pred_region
      %38 = dma.done [#allocation3], 128
    $region33: #{tpu_custom_call.1} parent=1 // pred_fallthru
      _
    %v40 = vld [vmem:[#allocation2] sm:$0xff]
    %v41 = vld [vmem:[%s1] sm:$0xf]
    %v42 = vld [vmem:[%s1 + $0x4] sm:$0xf]
    %v43 = vld [vmem:[%s1 + $0x8] sm:$0xf]
    %v44 = vld [vmem:[%s1 + $0xc] sm:$0xf]
    %v45 = vld [vmem:[%s2] sm:$0x1]
    %v46 = vpack.c.bf16 %v40, %v40
    %v48 = vlaneseq
    %v49 = vshrl.u32 %v48, 7
    %v50 = vsub.s32 0, %v49
    %v51 = vrot.slane %v45, %v50
    %v57 = vunpack.c.l.b16 %v41
    %v58 = vunpack.c.l.b16 %v42
    %v59 = vunpack.c.l.b16 %v43
    %v60 = vunpack.c.l.b16 %v44
    %v61 = vpack.c.b16 %v58, %v57
    %v62 = vpack.c.b16 %v60, %v59
    %vm65 = vcmask 261120
    %v67 = vsel %vm65, %v46, 0
    %69 = vmatprep.subr.bf16.mxu0 0
    %70 = vmatpush1.bf16.msra.mxu0 %v61
    %71 = vmatprep.subr.bf16.mxu0 0
    %72 = vmatpush1.bf16.msra.mxu0 %v62
    %73 = vmatprep.subr.bf16.mxu0 0
    %74 = vmatpush1.bf16.msra.mxu0 0
    %75 = vmatprep.subr.bf16.mxu0 0
    %76 = vmatpush1.bf16.msra.mxu0 0
    %77 = vmatprep.subr.bf16.mxu0 0
    %78 = vmatpush1.bf16.msra.mxu0 0
    %79 = vmatprep.subr.bf16.mxu0 0
    %80 = vmatpush1.bf16.msra.mxu0 0
    %81 = vmatprep.subr.bf16.mxu0 0
    %82 = vmatpush1.bf16.msra.mxu0 0
    %83 = vmatprep.subr.bf16.mxu0 0
    %84 = vmatpush1.bf16.msra.mxu0 0
    %85 = vmatprep.subr.bf16.mxu0 0
    %86 = vmatpush1.bf16.msra.mxu0 0
    %87 = vmatprep.subr.bf16.mxu0 0
    %88 = vmatpush1.bf16.msra.mxu0 0
    %89 = vmatprep.subr.bf16.mxu0 0
    %90 = vmatpush1.bf16.msra.mxu0 0
    %91 = vmatprep.subr.bf16.mxu0 0
    %92 = vmatpush1.bf16.msra.mxu0 0
    %93 = vmatprep.subr.bf16.mxu0 0
    %94 = vmatpush1.bf16.msra.mxu0 0
    %95 = vmatprep.subr.bf16.mxu0 0
    %96 = vmatpush1.bf16.msra.mxu0 0
    %97 = vmatprep.subr.bf16.mxu0 0
    %98 = vmatpush1.bf16.msra.mxu0 0
    %99 = vmatprep.subr.bf16.mxu0 0
    %100 = vmatpush1.bf16.msra.mxu0 0
    %101 = vmatprep.mubr.bf16.mxu0 0
    %102 = vmatmul.mubr.bf16.gmra.mrb[0].mxu0 %v67
    %v103 = vpop.f32.mrb[0].mxu0
    %v104 = vadd.f32 %v51, %v103
    %v105 = vpop.f32.mrb[0].mxu0
    %v106 = vpop.f32.mrb[0].mxu0
    %v107 = vpop.f32.mrb[0].mxu0
    %108 = vdwg.mxu0
    %v109 = vmax.f32 %v104, 0.0
    %v110 = vld [vmem:[%s3] sm:$0xf]
    %v111 = vld [vmem:[%s3 + $0x4] sm:$0xf]
    %v112 = vld [vmem:[%s3 + $0x8] sm:$0xf]
    %v113 = vld [vmem:[%s3 + $0xc] sm:$0xf]
    %v114 = vld [vmem:[%s3 + $0x10] sm:$0xf]
    %v115 = vld [vmem:[%s3 + $0x14] sm:$0xf]
    %v116 = vld [vmem:[%s3 + $0x18] sm:$0xf]
    %v117 = vld [vmem:[%s3 + $0x1c] sm:$0xf]
    %v118 = vld [vmem:[%s3 + $0x20] sm:$0xf]
    %v119 = vld [vmem:[%s3 + $0x24] sm:$0xf]
    %v120 = vld [vmem:[%s3 + $0x28] sm:$0xf]
    %v121 = vld [vmem:[%s3 + $0x2c] sm:$0xf]
    %v122 = vld [vmem:[%s3 + $0x30] sm:$0xf]
    %v123 = vld [vmem:[%s3 + $0x34] sm:$0xf]
    %v124 = vld [vmem:[%s3 + $0x38] sm:$0xf]
    %v125 = vld [vmem:[%s3 + $0x3c] sm:$0xf]
    %v126 = vld [vmem:[%s4] sm:$0x1]
    %v127 = vpack.c.bf16 %v109, %v109
    %v129 = vlaneseq
    %v130 = vshrl.u32 %v129, 7
    %v131 = vsub.s32 0, %v130
    %v132 = vrot.slane %v126, %v131
    %v150 = vunpack.c.l.b16 %v110
    %v151 = vunpack.c.l.b16 %v111
    %v152 = vunpack.c.l.b16 %v112
    %v153 = vunpack.c.l.b16 %v113
    %v154 = vunpack.c.l.b16 %v114
    %v155 = vunpack.c.l.b16 %v115
    %v156 = vunpack.c.l.b16 %v116
    %v157 = vunpack.c.l.b16 %v117
    %v158 = vunpack.c.l.b16 %v118
    %v159 = vunpack.c.l.b16 %v119
    %v160 = vunpack.c.l.b16 %v120
    %v161 = vunpack.c.l.b16 %v121
    %v162 = vunpack.c.l.b16 %v122
    %v163 = vunpack.c.l.b16 %v123
    %v164 = vunpack.c.l.b16 %v124
    %v165 = vunpack.c.l.b16 %v125
    %v166 = vpack.c.b16 %v151, %v150
    %v167 = vpack.c.b16 %v153, %v152
    %v168 = vpack.c.b16 %v155, %v154
    %v169 = vpack.c.b16 %v157, %v156
    %v170 = vpack.c.b16 %v159, %v158
    %v171 = vpack.c.b16 %v161, %v160
    %v172 = vpack.c.b16 %v163, %v162
    %v173 = vpack.c.b16 %v165, %v164
    %182 = vmatprep.subr.bf16.mxu0 0
    %183 = vmatpush1.bf16.msra.mxu0 %v166
    %184 = vmatprep.subr.bf16.mxu0 0
    %185 = vmatpush1.bf16.msra.mxu0 %v167
    %186 = vmatprep.subr.bf16.mxu0 0
    %187 = vmatpush1.bf16.msra.mxu0 %v168
    %188 = vmatprep.subr.bf16.mxu0 0
    %189 = vmatpush1.bf16.msra.mxu0 %v169
    %190 = vmatprep.subr.bf16.mxu0 0
    %191 = vmatpush1.bf16.msra.mxu0 %v170
    %192 = vmatprep.subr.bf16.mxu0 0
    %193 = vmatpush1.bf16.msra.mxu0 %v171
    %194 = vmatprep.subr.bf16.mxu0 0
    %195 = vmatpush1.bf16.msra.mxu0 %v172
    %196 = vmatprep.subr.bf16.mxu0 0
    %197 = vmatpush1.bf16.msra.mxu0 %v173
    %198 = vmatprep.subr.bf16.mxu0 0
    %199 = vmatpush1.bf16.msra.mxu0 0
    %200 = vmatprep.subr.bf16.mxu0 0
    %201 = vmatpush1.bf16.msra.mxu0 0
    %202 = vmatprep.subr.bf16.mxu0 0
    %203 = vmatpush1.bf16.msra.mxu0 0
    %204 = vmatprep.subr.bf16.mxu0 0
    %205 = vmatpush1.bf16.msra.mxu0 0
    %206 = vmatprep.subr.bf16.mxu0 0
    %207 = vmatpush1.bf16.msra.mxu0 0
    %208 = vmatprep.subr.bf16.mxu0 0
    %209 = vmatpush1.bf16.msra.mxu0 0
    %210 = vmatprep.subr.bf16.mxu0 0
    %211 = vmatpush1.bf16.msra.mxu0 0
    %212 = vmatprep.subr.bf16.mxu0 0
    %213 = vmatpush1.bf16.msra.mxu0 0
    %214 = vmatprep.mubr.bf16.mxu0 0
    %215 = vmatmul.mubr.bf16.gmra.mrb[0].mxu0 %v127
    %v216 = vpop.f32.mrb[0].mxu0
    %v217 = vadd.f32 %v132, %v216
    %v218 = vpop.f32.mrb[0].mxu0
    %v219 = vpop.f32.mrb[0].mxu0
    %v220 = vpop.f32.mrb[0].mxu0
    %221 = vdwg.mxu0
    %v222 = vmax.f32 %v217, 0.0
    %v223 = vld [vmem:[%s5] sm:$0xf]
    %v224 = vld [vmem:[%s5 + $0x4] sm:$0xf]
    %v225 = vld [vmem:[%s5 + $0x8] sm:$0xf]
    %v226 = vld [vmem:[%s5 + $0xc] sm:$0xf]
    %v227 = vld [vmem:[%s5 + $0x10] sm:$0xf]
    %v228 = vld [vmem:[%s5 + $0x14] sm:$0xf]
    %v229 = vld [vmem:[%s5 + $0x18] sm:$0xf]
    %v230 = vld [vmem:[%s5 + $0x1c] sm:$0xf]
    %v231 = vld [vmem:[%s5 + $0x20] sm:$0xf]
    %v232 = vld [vmem:[%s5 + $0x24] sm:$0xf]
    %v233 = vld [vmem:[%s5 + $0x28] sm:$0xf]
    %v234 = vld [vmem:[%s5 + $0x2c] sm:$0xf]
    %v235 = vld [vmem:[%s5 + $0x30] sm:$0xf]
    %v236 = vld [vmem:[%s5 + $0x34] sm:$0xf]
    %v237 = vld [vmem:[%s5 + $0x38] sm:$0xf]
    %v238 = vld [vmem:[%s5 + $0x3c] sm:$0xf]
    %v239 = vld [vmem:[%s6] sm:$0x1]
    %v240 = vpack.c.bf16 %v222, %v222
    %v242 = vlaneseq
    %v243 = vshrl.u32 %v242, 7
    %v244 = vsub.s32 0, %v243
    %v245 = vrot.slane %v239, %v244
    %v263 = vunpack.c.l.b16 %v223
    %v264 = vunpack.c.l.b16 %v224
    %v265 = vunpack.c.l.b16 %v225
    %v266 = vunpack.c.l.b16 %v226
    %v267 = vunpack.c.l.b16 %v227
    %v268 = vunpack.c.l.b16 %v228
    %v269 = vunpack.c.l.b16 %v229
    %v270 = vunpack.c.l.b16 %v230
    %v271 = vunpack.c.l.b16 %v231
    %v272 = vunpack.c.l.b16 %v232
    %v273 = vunpack.c.l.b16 %v233
    %v274 = vunpack.c.l.b16 %v234
    %v275 = vunpack.c.l.b16 %v235
    %v276 = vunpack.c.l.b16 %v236
    %v277 = vunpack.c.l.b16 %v237
    %v278 = vunpack.c.l.b16 %v238
    %v279 = vpack.c.b16 %v264, %v263
    %v280 = vpack.c.b16 %v266, %v265
    %v281 = vpack.c.b16 %v268, %v267
    %v282 = vpack.c.b16 %v270, %v269
    %v283 = vpack.c.b16 %v272, %v271
    %v284 = vpack.c.b16 %v274, %v273
    %v285 = vpack.c.b16 %v276, %v275
    %v286 = vpack.c.b16 %v278, %v277
    %295 = vmatprep.subr.bf16.mxu0 0
    %296 = vmatpush1.bf16.msra.mxu0 %v279
    %297 = vmatprep.subr.bf16.mxu0 0
    %298 = vmatpush1.bf16.msra.mxu0 %v280
    %299 = vmatprep.subr.bf16.mxu0 0
    %300 = vmatpush1.bf16.msra.mxu0 %v281
    %301 = vmatprep.subr.bf16.mxu0 0
    %302 = vmatpush1.bf16.msra.mxu0 %v282
    %303 = vmatprep.subr.bf16.mxu0 0
    %304 = vmatpush1.bf16.msra.mxu0 %v283
    %305 = vmatprep.subr.bf16.mxu0 0
    %306 = vmatpush1.bf16.msra.mxu0 %v284
    %307 = vmatprep.subr.bf16.mxu0 0
    %308 = vmatpush1.bf16.msra.mxu0 %v285
    %309 = vmatprep.subr.bf16.mxu0 0
    %310 = vmatpush1.bf16.msra.mxu0 %v286
    %311 = vmatprep.subr.bf16.mxu0 0
    %312 = vmatpush1.bf16.msra.mxu0 0
    %313 = vmatprep.subr.bf16.mxu0 0
    %314 = vmatpush1.bf16.msra.mxu0 0
    %315 = vmatprep.subr.bf16.mxu0 0
    %316 = vmatpush1.bf16.msra.mxu0 0
    %317 = vmatprep.subr.bf16.mxu0 0
    %318 = vmatpush1.bf16.msra.mxu0 0
    %319 = vmatprep.subr.bf16.mxu0 0
    %320 = vmatpush1.bf16.msra.mxu0 0
    %321 = vmatprep.subr.bf16.mxu0 0
    %322 = vmatpush1.bf16.msra.mxu0 0
    %323 = vmatprep.subr.bf16.mxu0 0
    %324 = vmatpush1.bf16.msra.mxu0 0
    %325 = vmatprep.subr.bf16.mxu0 0
    %326 = vmatpush1.bf16.msra.mxu0 0
    %327 = vmatprep.mubr.bf16.mxu0 0
    %328 = vmatmul.mubr.bf16.gmra.mrb[0].mxu0 %v240
    %v329 = vpop.f32.mrb[0].mxu0
    %v330 = vadd.f32 %v245, %v329
    %v331 = vpop.f32.mrb[0].mxu0
    %v332 = vpop.f32.mrb[0].mxu0
    %v333 = vpop.f32.mrb[0].mxu0
    %334 = vdwg.mxu0
    %vm335 = vcmask 130048
    %336 = vst.msk [vmem:[#allocation5] sm:$0xff] %vm335, %v330
    // Predicated region
    $region34: #{tpu_custom_call.1} parent=1 // pred_check
      _
    $region35: #{tpu_custom_call.1} parent=1 // pred_check_branch
      %338 = sbr.rel (0) target = $region37
    $region36: #{tpu_custom_call.1} parent=1 // pred_region
      %s340 = ssub.s32 128, 128
      %341 = vsyncadd [#allocation4], %s340
      %s343 = sshll.u32 [#allocation5], 4
      %s344 = int_to_ptr.vmem [resolvable:$true] %s343
      %346 = dma.vmem_to_hbm [thread:$0]  %s344, 128, %s7, [#allocation4]
    $region37: #{tpu_custom_call.1} parent=1 // pred_fallthru
      _
    // Predicated region
    $region38: #{tpu_custom_call.1} parent=1 // pred_check
      _
    $region39: #{tpu_custom_call.1} parent=1 // pred_check_branch
      %348 = sbr.rel (0) target = $region41
    $region40: #{tpu_custom_call.1} parent=1 // pred_region
      %349 = dma.done [#allocation4], 128
    $region41: #{tpu_custom_call.1} parent=1 // pred_fallthru
      _
    %350 = vsyncpa [#allocation3], 1
    %351 = vsyncpa [#allocation4], 1

</llo_original>
